<compile_context>
chip_gen: v6e
topology: v6e:2x2x1
jax: 0.10.0
libtpu: 0.0.40
codegen_flags: <defaults>
</compile_context>

<pallas_src>
import functools

import jax
import jax.numpy as jnp
from jax.experimental import pallas as pl
from jax.experimental.pallas import tpu as pltpu

_LANES = 128


def _round_up(a, b):
    return ((a + b - 1) // b) * b


def _focal_loss_kernel(x_ref, t_ref, out_ref, *, alpha, gamma, logits):
    i = pl.program_id(1)  # reduction axis (innermost)

    @pl.when(i == 0)
    def _():
        out_ref[...] = jnp.zeros_like(out_ref)

    x = x_ref[...].astype(jnp.float32)
    t = t_ref[...].astype(jnp.float32)

    if logits:
        # binary_cross_entropy_with_logits (stable form):
        #   max(x,0) - x*t + log(1 + exp(-|x|))
        bce = jnp.maximum(x, 0.0) - x * t + jnp.log1p(jnp.exp(-jnp.abs(x)))
    else:
        # binary_cross_entropy: -(t*log(p) + (1-t)*log(1-p)); logs clamped at
        # -100 to match PyTorch's internal clamp.
        log_p = jnp.maximum(jnp.log(x), -100.0)
        log_1mp = jnp.maximum(jnp.log(1.0 - x), -100.0)
        bce = -(t * log_p + (1.0 - t) * log_1mp)

    pt = jnp.exp(-bce)
    one_m_pt = 1.0 - pt

    g = float(gamma)
    if g == 2.0:
        mod = one_m_pt * one_m_pt            # avoid pow -> exp(log) on EUP
    elif g.is_integer() and 0 < g <= 8:
        mod = one_m_pt
        for _ in range(int(g) - 1):
            mod = mod * one_m_pt
    else:
        mod = one_m_pt ** g

    f_loss = alpha * mod * bce

    # Per-step partial reduce: (tm,128) -> (tm//8, 8, 128) sum over axis 0.
    # Layout-preserving reshape; pure sublane-aligned VPU adds, no XLU.
    tm = f_loss.shape[0]
    partial = jnp.sum(f_loss.reshape(tm // 8, 8, _LANES), axis=0)
    out_ref[...] += partial


def focal_loss(inputs, targets, *, alpha=1.0, gamma=2.0, logits=False,
               tm_max=8192, num_cores=2, target_dtype=None):
    """Mean focal loss over all elements (reduce=True path of the module)."""
    n_total = int(inputs.size)

    x = inputs.reshape(-1).astype(jnp.float32)
    t = targets.reshape(-1).astype(jnp.float32)
    if target_dtype is not None:
        # Optional: shrink the targets HBM stream (exact for 0/1 targets).
        t = t.astype(target_dtype)

    # Zero-loss pad values so padded elements contribute exactly 0 to the sum.
    if logits:
        pad_x, pad_t = 100.0, 1.0   # bce = log1p(exp(-100)) == 0 in f32
    else:
        pad_x, pad_t = 1.0, 1.0     # bce = -(1*log(1) + 0*clamp) == 0

    rows_needed = pl.cdiv(n_total, _LANES)
    tm = min(int(tm_max), _round_up(rows_needed, 8))
    tm = _round_up(tm, 8)
    blocks = pl.cdiv(rows_needed, tm)

    p = num_cores if (num_cores > 1 and blocks >= num_cores) else 1
    blocks_padded = _round_up(blocks, p)
    steps = blocks_padded // p
    rows_padded = blocks_padded * tm
    n_padded = rows_padded * _LANES

    pad_amt = n_padded - n_total
    if pad_amt:
        x = jnp.pad(x, (0, pad_amt), constant_values=pad_x)
        t = jnp.pad(t, (0, pad_amt), constant_values=pad_t)

    x2 = x.reshape(rows_padded, _LANES)
    t2 = t.reshape(rows_padded, _LANES)

    kernel = functools.partial(
        _focal_loss_kernel,
        alpha=float(alpha), gamma=float(gamma), logits=bool(logits),
    )

    cost = pl.CostEstimate(
        flops=10 * n_padded,
        transcendentals=3 * n_padded,
        bytes_accessed=(x2.size * x2.dtype.itemsize
                        + t2.size * t2.dtype.itemsize
                        + p * 8 * _LANES * 4),
    )

    partials = pl.pallas_call(
        kernel,
        out_shape=jax.ShapeDtypeStruct((p, 8, _LANES), jnp.float32),
        grid_spec=pltpu.PrefetchScalarGridSpec(
            num_scalar_prefetch=0,
            grid=(p, steps),
            in_specs=[
                pl.BlockSpec((tm, _LANES), lambda c, i: (c * steps + i, 0)),
                pl.BlockSpec((tm, _LANES), lambda c, i: (c * steps + i, 0)),
            ],
            # Leading dim squeezed: kernel sees a resident (8,128) accumulator.
            out_specs=pl.BlockSpec((None, 8, _LANES), lambda c, i: (c, 0, 0)),
        ),
        compiler_params=pltpu.CompilerParams(
            dimension_semantics=("parallel", "arbitrary"),
            vmem_limit_bytes=48 * 1024 * 1024,
        ),
        cost_estimate=cost,
    )(x2, t2)

    # Epilogue: single cross-lane reduce + divide in the wrapper.
    return jnp.sum(partials) / jnp.float32(n_total)


def focal_loss_ref(inputs, targets, *, alpha=1.0, gamma=2.0, logits=False):
    x = inputs.astype(jnp.float32)
    t = targets.astype(jnp.float32)
    if logits:
        bce = jnp.maximum(x, 0.0) - x * t + jnp.log1p(jnp.exp(-jnp.abs(x)))
    else:
        bce = -(t * jnp.maximum(jnp.log(x), -100.0)
                + (1.0 - t) * jnp.maximum(jnp.log(1.0 - x), -100.0))
    pt = jnp.exp(-bce)
    return jnp.mean(alpha * (1.0 - pt) ** gamma * bce)


if __name__ == "__main__":
    key = jax.random.PRNGKey(0)
    k1, k2, k3, k4 = jax.random.split(key, 4)

    # NCHW: batch=2, channels=4, spatial=16x16 (module default: logits=False).
    shape = (2, 4, 16, 16)
    inputs = jax.nn.sigmoid(jax.random.normal(k1, shape, dtype=jnp.float32))
    targets = (jax.random.uniform(k2, shape) > 0.5).astype(jnp.float32)

    out = focal_loss(inputs, targets, alpha=1.0, gamma=2.0, logits=False,
                     target_dtype=jnp.bfloat16)  # 0/1 targets: exact in bf16
    out = jax.block_until_ready(out)
    ref = focal_loss_ref(inputs, targets, alpha=1.0, gamma=2.0, logits=False)
    assert jnp.allclose(out, ref, rtol=1e-5, atol=1e-6), (out, ref)

    # Non-lane-aligned shape exercises the zero-loss padding path.
    shape2 = (2, 3, 7, 5)
    inputs2 = jax.nn.sigmoid(jax.random.normal(k3, shape2, dtype=jnp.float32))
    targets2 = (jax.random.uniform(k4, shape2) > 0.5).astype(jnp.float32)
    out2 = jax.block_until_ready(
        focal_loss(inputs2, targets2, alpha=1.0, gamma=2.0, logits=False))
    ref2 = focal_loss_ref(inputs2, targets2, alpha=1.0, gamma=2.0, logits=False)
    assert jnp.allclose(out2, ref2, rtol=1e-5, atol=1e-6), (out2, ref2)

    # logits=True path (module option) with padding.
    logits_in = jax.random.normal(k3, shape2, dtype=jnp.float32)
    out3 = jax.block_until_ready(
        focal_loss(logits_in, targets2, alpha=1.0, gamma=2.0, logits=True))
    ref3 = focal_loss_ref(logits_in, targets2, alpha=1.0, gamma=2.0, logits=True)
    assert jnp.allclose(out3, ref3, rtol=1e-5, atol=1e-6), (out3, ref3)

    print("KERNEL_OK")
</pallas_src>

<mosaic_0001>
module attributes {stable_mosaic.version = 11 : i64} {
  func.func @_focal_loss_kernel(%arg0: i32, %arg1: i32, %arg2: memref<16x128xf32, #tpu.memory_space<vmem>>, %arg3: memref<16x128xbf16, #tpu.memory_space<vmem>>, %arg4: memref<1x8x128xf32, #tpu.memory_space<vmem>>) attributes {dimension_semantics = [#tpu.dimension_semantics<parallel>, #tpu.dimension_semantics<arbitrary>], iteration_bounds = array<i64: 1, 1>, scalar_prefetch = 0 : i64, scratch_operands = 0 : i64, tpu.core_type = #tpu.core_type<tc>, window_params = [{transform_indices = @transform_0, window_bounds = array<i64: 16, 128>}, {transform_indices = @transform_1, window_bounds = array<i64: 16, 128>}, {transform_indices = @transform_2, window_bounds = array<i64: 1, 8, 128>}]} {
    %c0_i32 = arith.constant 0 : i32
    %0 = arith.cmpi eq, %arg1, %c0_i32 : i32
    %1 = arith.extui %0 : i1 to i32
    %c0_i32_0 = arith.constant 0 : i32
    %2 = arith.cmpi ne, %1, %c0_i32_0 : i32
    scf.if %2 {
      %cst_18 = arith.constant 0.000000e+00 : f32
      %38 = vector.broadcast %cst_18 : f32 to vector<8x128xf32>
      %c0_19 = arith.constant 0 : index
      %c0_20 = arith.constant 0 : index
      %c0_21 = arith.constant 0 : index
      %39 = vector.load %arg4[%c0_19, %c0_20, %c0_21] : memref<1x8x128xf32, #tpu.memory_space<vmem>>, vector<1x8x128xf32>
      %40 = vector.shape_cast %39 : vector<1x8x128xf32> to vector<8x128xf32>
      %41 = vector.shape_cast %38 : vector<8x128xf32> to vector<1x8x128xf32>
      tpu.vector_store %arg4[%c0_19, %c0_20, %c0_21], %41 {strides = array<i32>} : memref<1x8x128xf32, #tpu.memory_space<vmem>>, vector<1x8x128xf32>,
    } else {
    }
    %c0 = arith.constant 0 : index
    %c0_1 = arith.constant 0 : index
    %3 = vector.load %arg2[%c0, %c0_1] : memref<16x128xf32, #tpu.memory_space<vmem>>, vector<16x128xf32>
    %c0_2 = arith.constant 0 : index
    %c0_3 = arith.constant 0 : index
    %4 = vector.load %arg3[%c0_2, %c0_3] : memref<16x128xbf16, #tpu.memory_space<vmem>>, vector<16x128xbf16>
    %5 = arith.extf %4 : vector<16x128xbf16> to vector<16x128xf32>
    %6 = math.log %3 : vector<16x128xf32>
    %cst = arith.constant -1.000000e+02 : f32
    %7 = vector.broadcast %cst : f32 to vector<16x128xf32>
    %8 = arith.maximumf %6, %7 : vector<16x128xf32>
    %cst_4 = arith.constant 1.000000e+00 : f32
    %9 = vector.broadcast %cst_4 : f32 to vector<16x128xf32>
    %10 = arith.subf %9, %3 : vector<16x128xf32>
    %11 = math.log %10 : vector<16x128xf32>
    %cst_5 = arith.constant -1.000000e+02 : f32
    %12 = vector.broadcast %cst_5 : f32 to vector<16x128xf32>
    %13 = arith.maximumf %11, %12 : vector<16x128xf32>
    %14 = arith.mulf %5, %8 : vector<16x128xf32>
    %cst_6 = arith.constant 1.000000e+00 : f32
    %15 = vector.broadcast %cst_6 : f32 to vector<16x128xf32>
    %16 = arith.subf %15, %5 : vector<16x128xf32>
    %17 = arith.mulf %16, %13 : vector<16x128xf32>
    %18 = arith.addf %14, %17 : vector<16x128xf32>
    %cst_7 = arith.constant 0.000000e+00 : f32
    %19 = vector.broadcast %cst_7 : f32 to vector<16x128xf32>
    %20 = arith.subf %19, %18 : vector<16x128xf32>
    %cst_8 = arith.constant 0.000000e+00 : f32
    %21 = vector.broadcast %cst_8 : f32 to vector<16x128xf32>
    %22 = arith.subf %21, %20 : vector<16x128xf32>
    %23 = math.exp %22 : vector<16x128xf32>
    %cst_9 = arith.constant 1.000000e+00 : f32
    %24 = vector.broadcast %cst_9 : f32 to vector<16x128xf32>
    %25 = arith.subf %24, %23 : vector<16x128xf32>
    %26 = arith.mulf %25, %25 : vector<16x128xf32>
    %cst_10 = arith.constant 1.000000e+00 : f32
    %27 = vector.broadcast %cst_10 : f32 to vector<16x128xf32>
    %28 = arith.mulf %27, %26 : vector<16x128xf32>
    %29 = arith.mulf %28, %20 : vector<16x128xf32>
    %30 = vector.shape_cast %29 : vector<16x128xf32> to vector<2x8x128xf32>
    %cst_11 = arith.constant dense<0.000000e+00> : vector<8x128xf32>
    %31 = vector.multi_reduction <add>, %30, %cst_11 [0] : vector<2x8x128xf32> to vector<8x128xf32>
    %c0_12 = arith.constant 0 : index
    %c0_13 = arith.constant 0 : index
    %c0_14 = arith.constant 0 : index
    %32 = vector.load %arg4[%c0_12, %c0_13, %c0_14] : memref<1x8x128xf32, #tpu.memory_space<vmem>>, vector<1x8x128xf32>
    %33 = vector.shape_cast %32 : vector<1x8x128xf32> to vector<8x128xf32>
    %34 = arith.addf %33, %31 : vector<8x128xf32>
    %c0_15 = arith.constant 0 : index
    %c0_16 = arith.constant 0 : index
    %c0_17 = arith.constant 0 : index
    %35 = vector.load %arg4[%c0_15, %c0_16, %c0_17] : memref<1x8x128xf32, #tpu.memory_space<vmem>>, vector<1x8x128xf32>
    %36 = vector.shape_cast %35 : vector<1x8x128xf32> to vector<8x128xf32>
    %37 = vector.shape_cast %34 : vector<8x128xf32> to vector<1x8x128xf32>
    tpu.vector_store %arg4[%c0_15, %c0_16, %c0_17], %37 {strides = array<i32>} : memref<1x8x128xf32, #tpu.memory_space<vmem>>, vector<1x8x128xf32>,
    return
  }
  func.func @transform_0(%arg0: i32, %arg1: i32) -> (i32, i32) {
    %c1_i32 = arith.constant 1 : i32
    %0 = arith.muli %arg0, %c1_i32 : i32
    %1 = arith.addi %0, %arg1 : i32
    %c0_i32 = arith.constant 0 : i32
    %c0_i32_0 = arith.constant 0 : i32
    return %1, %c0_i32 : i32, i32
  }
  func.func @transform_1(%arg0: i32, %arg1: i32) -> (i32, i32) {
    %c1_i32 = arith.constant 1 : i32
    %0 = arith.muli %arg0, %c1_i32 : i32
    %1 = arith.addi %0, %arg1 : i32
    %c0_i32 = arith.constant 0 : i32
    %c0_i32_0 = arith.constant 0 : i32
    return %1, %c0_i32 : i32, i32
  }
  func.func @transform_2(%arg0: i32, %arg1: i32) -> (i32, i32, i32) {
    %c0_i32 = arith.constant 0 : i32
    %c0_i32_0 = arith.constant 0 : i32
    %c0_i32_1 = arith.constant 0 : i32
    return %arg0, %c0_i32, %c0_i32_0 : i32, i32, i32
  }
}

</mosaic_0001>

<llo_original>
// kernel: tpu_custom_call.1
$region0: #{tpu_custom_call.1}
  #allocation0 [shape = 'u32[]', space=smem, size = 0x4, offset = 0x4, fixed_abs, tag = 'smem constant byte address 0x4 - core index']
  #allocation1 [shape = 'u32[144,128]{1,0:T(1,128)}', space=vmem, size = 0x12000, scoped, tag = 'internal scratch']
  %s0 = inlined_call_operand.hbm [shape: f32[16,128], index: 0, kind: input, shape index: {}]
  %s1 = inlined_call_operand.hbm [shape: bf16[16,128], index: 1, kind: input, shape index: {}]
  %s2 = inlined_call_operand.hbm [shape: f32[1,8,128], index: 2, kind: output, shape index: {}]
  %s3 = sld [smem:[#allocation0]]
  $region30: #{tpu_custom_call.1} parent=0
    _
  %s5 = ssub.s32 1, %s3
  %s6 = scalar_select 0, %s5, %s3
  $region1: #{tpu_custom_call.1} parent=0
    #allocation2 [shape = 'u8[8192]{0}', space=vmem, size = 0x2000, scoped, tag = 'input window, operand 0, single buffered']
    #allocation3 [shape = 's32[1]{0}', space=sflag, size = 0x4, scoped, tag = 'scoped memory for tpu_custom_call.1']
    #allocation4 [shape = 's32[1]{0}', space=sflag, size = 0x4, scoped, tag = 'scoped memory for tpu_custom_call.1']
    #allocation5 [shape = 'u8[4096]{0}', space=vmem, size = 0x1000, scoped, tag = 'input window, operand 1, single buffered']
    #allocation6 [shape = 's32[1]{0}', space=sflag, size = 0x4, scoped, tag = 'scoped memory for tpu_custom_call.1']
    #allocation7 [shape = 'u8[4096]{0}', space=vmem, size = 0x1000, scoped, tag = 'output window, operand 0, single buffered']
    %7 = vsyncpa [#allocation3], 0
    %8 = vsyncpa [#allocation6], 0
    %9 = vsyncpa [#allocation4], 0
    // Predicated region
    $region2: #{tpu_custom_call.1} parent=1 // pred_check
      _
    $region3: #{tpu_custom_call.1} parent=1 // pred_check_branch
      %11 = sbr.rel (0) target = $region5
    $region4: #{tpu_custom_call.1} parent=1 // pred_region
      %s12 = sadd.s32 0, 0
      %s13 = smul.u32 2, %s12
      %s15 = ssub.s32 256, 256
      %16 = vsyncadd [#allocation3], %s15
      %s17 = smul.addr %s13, 128
      %s18 = scalar_lea.hbm %s0, %s17
      %s19 = sshll.u32 [#allocation2], 4
      %s20 = int_to_ptr.vmem [resolvable:$true] %s19
      %25 = dma.hbm_to_vmem [thread:$0]  %s18, 256, %s20, [#allocation3], 128, 128, 8
    $region5: #{tpu_custom_call.1} parent=1 // pred_fallthru
      _
    // Predicated region
    $region6: #{tpu_custom_call.1} parent=1 // pred_check
      _
    $region7: #{tpu_custom_call.1} parent=1 // pred_check_branch
      %27 = sbr.rel (0) target = $region9
    $region8: #{tpu_custom_call.1} parent=1 // pred_region
      %s28 = sadd.s32 0, 0
      %s29 = smul.u32 2, %s28
      %s31 = ssub.s32 128, 128
      %32 = vsyncadd [#allocation6], %s31
      %s33 = smul.addr %s29, 64
      %s34 = scalar_lea.hbm %s1, %s33
      %s35 = sshll.u32 [#allocation5], 4
      %s36 = int_to_ptr.vmem [resolvable:$true] %s35
      %41 = dma.hbm_to_vmem [thread:$0]  %s34, 128, %s36, [#allocation6], 64, 64, 4
    $region9: #{tpu_custom_call.1} parent=1 // pred_fallthru
      _
    // Predicated region
    $region10: #{tpu_custom_call.1} parent=1 // pred_check
      _
    $region11: #{tpu_custom_call.1} parent=1 // pred_check_branch
      %43 = sbr.rel (0) target = $region13
    $region12: #{tpu_custom_call.1} parent=1 // pred_region
      %44 = dma.done [#allocation3], 256
    $region13: #{tpu_custom_call.1} parent=1 // pred_fallthru
      _
    // Predicated region
    $region14: #{tpu_custom_call.1} parent=1 // pred_check
      _
    $region15: #{tpu_custom_call.1} parent=1 // pred_check_branch
      %46 = sbr.rel (0) target = $region17
    $region16: #{tpu_custom_call.1} parent=1 // pred_region
      %47 = dma.done [#allocation6], 128
    $region17: #{tpu_custom_call.1} parent=1 // pred_fallthru
      _
    %s48 = sadd.s32 0, 0
    %s49 = smul.u32 2, %s48
    %s50 = sadd.s32 0, 0
    %s51 = smul.u32 2, %s50
    %p52 = scmp.eq.s32.totalorder 0, 0
    // Predicated region
    $region18: #{tpu_custom_call.1} parent=1 // pred_check
      %p53 = pneg %p52
    $region19: #{tpu_custom_call.1} parent=1 // pred_check_branch
      %55 = sbr.rel (%p53) target = $region21
    $region20: #{tpu_custom_call.1} parent=1 // pred_region
      %56 = vst [vmem:[#allocation7] sm:$0xff] 0.0
    $region21: #{tpu_custom_call.1} parent=1 // pred_fallthru
      _
    %v57 = vld [vmem:[#allocation2] sm:$0xff]
    %v58 = vld [vmem:[#allocation2 + $0x8] sm:$0xff]
    %v59 = vld [vmem:[#allocation5] sm:$0xf]
    %v60 = vld [vmem:[#allocation5 + $0x4] sm:$0xf]
    %v61 = vunpack.c.l.bf16 %v59
    %v62 = vunpack.c.l.bf16 %v60
    %v63 = vlog2.pop %v57
    %v64 = vmul.f32 %v63, 0.6931472
    %v65 = vlog2.pop %v58
    %v66 = vmul.f32 %v65, 0.6931472
    %v67 = vmax.f32 %v64, -100.0
    %v68 = vmax.f32 %v66, -100.0
    %v69 = vsub.f32 1.0, %v57
    %v70 = vsub.f32 1.0, %v58
    %v71 = vlog2.pop %v69
    %v72 = vmul.f32 %v71, 0.6931472
    %v73 = vlog2.pop %v70
    %v74 = vmul.f32 %v73, 0.6931472
    %v75 = vmax.f32 %v72, -100.0
    %v76 = vmax.f32 %v74, -100.0
    %v77 = vmul.f32 %v61, %v67
    %v78 = vmul.f32 %v62, %v68
    %v79 = vsub.f32 1.0, %v61
    %v80 = vsub.f32 1.0, %v62
    %v81 = vmul.f32 %v79, %v75
    %v82 = vmul.f32 %v80, %v76
    %v83 = vadd.f32 %v77, %v81
    %v84 = vadd.f32 %v78, %v82
    %v85 = vsub.f32 0.0, %v83
    %v86 = vsub.f32 0.0, %v84
    %v87 = vsub.f32 0.0, %v85
    %v88 = vsub.f32 0.0, %v86
    %v89 = vmul.f32 %v87, 1.442695
    %v90 = vpow.pop %v89
    %v91 = vmul.f32 %v88, 1.442695
    %v92 = vpow.pop %v91
    %v93 = vsub.f32 1.0, %v90
    %v94 = vsub.f32 1.0, %v92
    %v95 = vmul.f32 %v93, %v93
    %v96 = vmul.f32 %v94, %v94
    %v97 = vmul.f32 %v95, %v85
    %v98 = vmul.f32 %v96, %v86
    %v99 = vadd.f32 %v97, %v98
    %v100 = vld [vmem:[#allocation7] sm:$0xff]
    %v101 = vadd.f32 %v100, %v99
    %102 = vst [vmem:[#allocation7] sm:$0xff] %v101
    // Predicated region
    $region22: #{tpu_custom_call.1} parent=1 // pred_check
      _
    $region23: #{tpu_custom_call.1} parent=1 // pred_check_branch
      %104 = sbr.rel (0) target = $region25
    $region24: #{tpu_custom_call.1} parent=1 // pred_region
      %s106 = ssub.s32 128, 128
      %107 = vsyncadd [#allocation4], %s106
      %s109 = sshll.u32 [#allocation7], 4
      %s110 = int_to_ptr.vmem [resolvable:$true] %s109
      %112 = dma.vmem_to_hbm [thread:$0]  %s110, 128, %s2, [#allocation4]
    $region25: #{tpu_custom_call.1} parent=1 // pred_fallthru
      _
    // Predicated region
    $region26: #{tpu_custom_call.1} parent=1 // pred_check
      _
    $region27: #{tpu_custom_call.1} parent=1 // pred_check_branch
      %114 = sbr.rel (0) target = $region29
    $region28: #{tpu_custom_call.1} parent=1 // pred_region
      %115 = dma.done [#allocation4], 128
    $region29: #{tpu_custom_call.1} parent=1 // pred_fallthru
      _
    %116 = vsyncpa [#allocation3], 1
    %117 = vsyncpa [#allocation6], 1
    %118 = vsyncpa [#allocation4], 1

</llo_original>
